<compile_context>
chip_gen: v5e
topology: v5e:2x2
jax: 0.10.0
libtpu: 0.0.40
codegen_flags: <defaults>
</compile_context>

<pallas_src>
import jax
import jax.numpy as jnp
from jax import lax
from jax.experimental import pallas as pl
from jax.experimental.pallas import tpu as pltpu


_LANE = 128
_SUBLANE = 8
_MAX_TILE_B = 512                      # ~85% of HBM roofline; larger adds little
_VMEM_BUDGET = 40 * 1024 * 1024        # conservative: fits v7x 64 MiB physical
_RESIDENT_W_LIMIT = 16 * 1024 * 1024   # keep full weight resident below this
_F32 = 4


def _round_up(x, m):
    return ((x + m - 1) // m) * m


def _pick_batch_tile(B, bytes_per_row, reserved_bytes):
    """Largest sublane-aligned batch tile fitting the VMEM budget."""
    avail = _VMEM_BUDGET - reserved_bytes
    tb = max(avail // bytes_per_row, _SUBLANE)
    tb = int(min(tb, _MAX_TILE_B))
    if tb >= B:
        return B                      # one tile; block == full dim is legal
    return max((tb // _SUBLANE) * _SUBLANE, _SUBLANE)


def _vmem_limit(est_bytes):
    return int(min(max(est_bytes + (4 << 20), 24 << 20), 56 << 20))


# ---------------------------------------------------------------------------
# is_matrix=True path: tiled matmul, fused bias epilogue.
# ---------------------------------------------------------------------------
def _matmul_kernel(x_ref, w_ref, b_ref, o_ref):
    # x: (tb, D), w: (tn, D) rows of the nn.Linear weight. Contract on the
    # shared in_features axis (NT matmul) -> x @ W.T with no transpose pass.
    y = lax.dot_general(
        x_ref[...], w_ref[...],
        dimension_numbers=(((1,), (1,)), ((), ())),
        preferred_element_type=jnp.float32)
    o_ref[...] = (y + b_ref[...]).astype(o_ref.dtype)


def _matmul_forward(x, weight, bias2):
    B, D = x.shape

    # Weight blocking: resident (single-buffered) when small enough, else
    # lane-dense (*, 512) output-feature tiles (double-buffered by default).
    if D * D * _F32 <= _RESIDENT_W_LIMIT:
        tn, w_bufs = D, 1
    else:
        tn, w_bufs = (512 if D >= 512 else _round_up(D, _LANE)), 2
    n_j = pl.cdiv(D, tn)

    w_block_bytes = tn * D * _F32 * w_bufs
    b_block_bytes = tn * _F32 * (1 if n_j == 1 else 2)
    bytes_per_row = 2 * _F32 * (D + tn)          # x + out, double-buffered
    tb = _pick_batch_tile(B, bytes_per_row, w_block_bytes + b_block_bytes)
    n_i = pl.cdiv(B, tb)
    # TODO(synk): for D large enough that a (512, D) weight block alone blows
    # the budget (~D > 10k), a K-axis grid with a VMEM accumulator is needed.

    vmem_est = w_block_bytes + b_block_bytes + tb * bytes_per_row

    const_kw = dict(pipeline_mode=pl.Buffered(1)) if n_j == 1 else {}

    return pl.pallas_call(
        _matmul_kernel,
        out_shape=jax.ShapeDtypeStruct((B, D), jnp.float32),
        grid_spec=pltpu.PrefetchScalarGridSpec(
            num_scalar_prefetch=0,
            grid=(n_j, n_i),
            in_specs=[
                pl.BlockSpec((tb, D), lambda j, i: (i, 0)),              # x
                pl.BlockSpec((tn, D), lambda j, i: (j, 0), **const_kw),  # W rows
                pl.BlockSpec((1, tn), lambda j, i: (0, j), **const_kw),  # bias
            ],
            out_specs=pl.BlockSpec((tb, tn), lambda j, i: (i, j)),
        ),
        compiler_params=pltpu.CompilerParams(
            dimension_semantics=("parallel", "parallel"),
            vmem_limit_bytes=_vmem_limit(vmem_est)),
    )(x, weight, bias2)


# ---------------------------------------------------------------------------
# is_matrix=False path: weight is masked to its diagonal, so the linear is a
# pure elementwise op o = x * diag(W) + b  (VPU only, no weight matrix at all).
# ---------------------------------------------------------------------------
def _diag_kernel(x_ref, d_ref, b_ref, o_ref):
    o_ref[...] = (x_ref[...] * d_ref[...] + b_ref[...]).astype(o_ref.dtype)


def _diag_forward(x, diag2, bias2):
    B, D = x.shape
    const_bytes = 2 * D * _F32                   # diag + bias, single-buffered
    bytes_per_row = 2 * _F32 * (D + D)           # x + out, double-buffered
    tb = _pick_batch_tile(B, bytes_per_row, const_bytes)
    n_i = pl.cdiv(B, tb)
    vmem_est = const_bytes + tb * bytes_per_row

    return pl.pallas_call(
        _diag_kernel,
        out_shape=jax.ShapeDtypeStruct((B, D), jnp.float32),
        grid_spec=pltpu.PrefetchScalarGridSpec(
            num_scalar_prefetch=0,
            grid=(n_i,),
            in_specs=[
                pl.BlockSpec((tb, D), lambda i: (i, 0)),                 # x
                pl.BlockSpec((1, D), lambda i: (0, 0),
                             pipeline_mode=pl.Buffered(1)),              # diag
                pl.BlockSpec((1, D), lambda i: (0, 0),
                             pipeline_mode=pl.Buffered(1)),              # bias
            ],
            out_specs=pl.BlockSpec((tb, D), lambda i: (i, 0)),
        ),
        compiler_params=pltpu.CompilerParams(
            dimension_semantics=("parallel",),
            vmem_limit_bytes=_vmem_limit(vmem_est)),
    )(x, diag2, bias2)


# ---------------------------------------------------------------------------
# Public wrapper mirroring LinearModel.forward.
# ---------------------------------------------------------------------------
def linear_model_forward(x, weight, bias, *, is_matrix=True):
    """x: (B, D); weight: (D, D) nn.Linear layout (out x in); bias: (D,)."""
    B, D = x.shape
    assert weight.shape == (D, D) and bias.shape == (D,)

    x = x.astype(jnp.float32)
    weight = weight.astype(jnp.float32)
    bias2 = bias.astype(jnp.float32).reshape(1, D)

    if not is_matrix:
        # TODO(synk): PyTorch mutates self.linear.weight.data in place here so
        # later calls see the masked weight; we apply the mask functionally.
        diag2 = jnp.diagonal(weight).reshape(1, D)
        return _diag_forward(x, diag2, bias2)
    return _matmul_forward(x, weight, bias2)


def _ref_forward(x, weight, bias, *, is_matrix=True):
    """Pure-JAX reference mirroring the PyTorch forward."""
    w = weight
    if not is_matrix:
        w = w * jnp.eye(w.shape[0], dtype=w.dtype)
    return x @ w.T + bias


if __name__ == "__main__":
    key = jax.random.PRNGKey(0)
    k1, k2, k3 = jax.random.split(key, 3)

    batch, input_size = 16, 32
    x = jax.random.normal(k1, (batch, input_size), dtype=jnp.float32)
    bound = 1.0 / (input_size ** 0.5)
    weight = jax.random.uniform(k2, (input_size, input_size),
                                minval=-bound, maxval=bound, dtype=jnp.float32)
    bias = jax.random.uniform(k3, (input_size,),
                              minval=-bound, maxval=bound, dtype=jnp.float32)

    # is_matrix=True path (plain linear, MXU kernel).
    y_full = linear_model_forward(x, weight, bias, is_matrix=True)
    # is_matrix=False path (diagonal weight, elementwise VPU kernel).
    y_diag = linear_model_forward(x, weight, bias, is_matrix=False)
    jax.block_until_ready((y_full, y_diag))

    ref_full = _ref_forward(x, weight, bias, is_matrix=True)
    ref_diag = _ref_forward(x, weight, bias, is_matrix=False)

    assert y_full.shape == (batch, input_size)
    assert y_diag.shape == (batch, input_size)
    assert bool(jnp.allclose(y_full, ref_full, atol=1e-5, rtol=1e-5))
    assert bool(jnp.allclose(y_diag, ref_diag, atol=1e-5, rtol=1e-5))

    print("KERNEL_OK")
</pallas_src>

<mosaic_0001>
module attributes {stable_mosaic.version = 11 : i64} {
  func.func @_matmul_kernel(%arg0: i32, %arg1: i32, %arg2: memref<16x32xf32, #tpu.memory_space<vmem>>, %arg3: memref<32x32xf32, #tpu.memory_space<vmem>>, %arg4: memref<1x32xf32, #tpu.memory_space<vmem>>, %arg5: memref<16x32xf32, #tpu.memory_space<vmem>>) attributes {dimension_semantics = [#tpu.dimension_semantics<parallel>, #tpu.dimension_semantics<parallel>], iteration_bounds = array<i64: 1, 1>, scalar_prefetch = 0 : i64, scratch_operands = 0 : i64, tpu.core_type = #tpu.core_type<tc>, window_params = [{transform_indices = @transform_0, window_bounds = array<i64: 16, 32>}, {pipeline_mode = #tpu.pipeline_mode<synchronous>, transform_indices = @transform_1, window_bounds = array<i64: 32, 32>}, {pipeline_mode = #tpu.pipeline_mode<synchronous>, transform_indices = @transform_2, window_bounds = array<i64: 1, 32>}, {transform_indices = @transform_3, window_bounds = array<i64: 16, 32>}]} {
    %c0 = arith.constant 0 : index
    %c0_0 = arith.constant 0 : index
    %0 = vector.load %arg2[%c0, %c0_0] : memref<16x32xf32, #tpu.memory_space<vmem>>, vector<16x32xf32>
    %c0_1 = arith.constant 0 : index
    %c0_2 = arith.constant 0 : index
    %1 = vector.load %arg3[%c0_1, %c0_2] : memref<32x32xf32, #tpu.memory_space<vmem>>, vector<32x32xf32>
    %cst = arith.constant dense<0.000000e+00> : vector<16x32xf32>
    %2 = tpu.matmul %0, %1, %cst {dimension_numbers = #tpu.dot_dimension_numbers<[1], [1], [0], [0], [0, 0, 1, 0], [], []>} : vector<16x32xf32>, vector<32x32xf32>, vector<16x32xf32> -> vector<16x32xf32>
    %c0_3 = arith.constant 0 : index
    %c0_4 = arith.constant 0 : index
    %3 = vector.load %arg4[%c0_3, %c0_4] : memref<1x32xf32, #tpu.memory_space<vmem>>, vector<1x32xf32>
    %4 = vector.broadcast %3 : vector<1x32xf32> to vector<16x32xf32>
    %5 = arith.addf %2, %4 : vector<16x32xf32>
    %c0_5 = arith.constant 0 : index
    %c0_6 = arith.constant 0 : index
    %6 = vector.load %arg5[%c0_5, %c0_6] : memref<16x32xf32, #tpu.memory_space<vmem>>, vector<16x32xf32>
    tpu.vector_store %arg5[%c0_5, %c0_6], %5 {strides = array<i32>} : memref<16x32xf32, #tpu.memory_space<vmem>>, vector<16x32xf32>,
    return
  }
  func.func @transform_0(%arg0: i32, %arg1: i32) -> (i32, i32) {
    %c0_i32 = arith.constant 0 : i32
    %c0_i32_0 = arith.constant 0 : i32
    return %arg1, %c0_i32 : i32, i32
  }
  func.func @transform_1(%arg0: i32, %arg1: i32) -> (i32, i32) {
    %c0_i32 = arith.constant 0 : i32
    %c0_i32_0 = arith.constant 0 : i32
    return %arg0, %c0_i32 : i32, i32
  }
  func.func @transform_2(%arg0: i32, %arg1: i32) -> (i32, i32) {
    %c0_i32 = arith.constant 0 : i32
    %c0_i32_0 = arith.constant 0 : i32
    return %c0_i32, %arg0 : i32, i32
  }
  func.func @transform_3(%arg0: i32, %arg1: i32) -> (i32, i32) {
    %c0_i32 = arith.constant 0 : i32
    return %arg1, %arg0 : i32, i32
  }
}

</mosaic_0001>

<llo_original>
// kernel: tpu_custom_call.1
$region0: #{tpu_custom_call.1}
  #allocation0 [shape = 'u32[]', space=smem, size = 0x4, offset = 0x4, fixed_abs, tag = 'smem constant byte address 0x4 - core index']
  #allocation1 [shape = 'u32[72,128]{1,0:T(1,128)}', space=vmem, size = 0x9000, scoped, tag = 'internal scratch']
  %s0 = inlined_call_operand.hbm [shape: f32[16,32], index: 0, kind: input, shape index: {}]
  %s1 = inlined_call_operand.hbm [shape: f32[32,32], index: 1, kind: input, shape index: {}]
  %s2 = inlined_call_operand.vmem [shape: f32[1,32], index: 2, kind: input, shape index: {}]
  %s3 = inlined_call_operand.hbm [shape: f32[16,32], index: 3, kind: output, shape index: {}]
  %s4 = sld [smem:[#allocation0]]
  $region30: #{tpu_custom_call.1} parent=0
    _
  %s6 = ssub.s32 1, %s4
  %s7 = scalar_select 0, %s6, %s4
  $region1: #{tpu_custom_call.1} parent=0
    #allocation2 [shape = 'u8[8192]{0}', space=vmem, size = 0x2000, scoped, tag = 'input window, operand 0, single buffered']
    #allocation3 [shape = 's32[1]{0}', space=sflag, size = 0x4, scoped, tag = 'scoped memory for tpu_custom_call.1']
    #allocation4 [shape = 's32[1]{0}', space=sflag, size = 0x4, scoped, tag = 'scoped memory for tpu_custom_call.1']
    #allocation5 [shape = 'u8[16384]{0}', space=vmem, size = 0x4000, scoped, tag = 'input window, operand 1, single buffered']
    #allocation6 [shape = 's32[1]{0}', space=sflag, size = 0x4, scoped, tag = 'scoped memory for tpu_custom_call.1']
    #allocation7 [shape = 'u8[8192]{0}', space=vmem, size = 0x2000, scoped, tag = 'output window, operand 0, single buffered']
    %8 = vsyncpa [#allocation3], 0
    %9 = vsyncpa [#allocation6], 0
    %10 = vsyncpa [#allocation4], 0
    // Predicated region
    $region2: #{tpu_custom_call.1} parent=1 // pred_check
      _
    $region3: #{tpu_custom_call.1} parent=1 // pred_check_branch
      %12 = sbr.rel (0) target = $region5
    $region4: #{tpu_custom_call.1} parent=1 // pred_region
      %14 = vsyncadd [#allocation3], 0
      %s15 = sshll.u32 %s0, 4
      %s16 = int_to_ptr.hbm [resolvable:$true] %s15
      %s17 = sshll.u32 [#allocation2], 4
      %s18 = int_to_ptr.vmem [resolvable:$true] %s17
      %23 = dma.hbm_to_vmem [thread:$0]  %s16, 256, %s18, [#allocation3], 128, 128, 8
    $region5: #{tpu_custom_call.1} parent=1 // pred_fallthru
      _
    // Predicated region
    $region6: #{tpu_custom_call.1} parent=1 // pred_check
      _
    $region7: #{tpu_custom_call.1} parent=1 // pred_check_branch
      %25 = sbr.rel (0) target = $region9
    $region8: #{tpu_custom_call.1} parent=1 // pred_region
      %27 = vsyncadd [#allocation6], 0
      %s28 = sshll.u32 %s1, 4
      %s29 = int_to_ptr.hbm [resolvable:$true] %s28
      %s30 = sshll.u32 [#allocation5], 4
      %s31 = int_to_ptr.vmem [resolvable:$true] %s30
      %36 = dma.hbm_to_vmem [thread:$0]  %s29, 512, %s31, [#allocation6], 128, 128, 8
    $region9: #{tpu_custom_call.1} parent=1 // pred_fallthru
      _
    // Predicated region
    $region10: #{tpu_custom_call.1} parent=1 // pred_check
      _
    $region11: #{tpu_custom_call.1} parent=1 // pred_check_branch
      %38 = sbr.rel (0) target = $region13
    $region12: #{tpu_custom_call.1} parent=1 // pred_region
      _
    $region13: #{tpu_custom_call.1} parent=1 // pred_fallthru
      _
    // Predicated region
    $region14: #{tpu_custom_call.1} parent=1 // pred_check
      _
    $region15: #{tpu_custom_call.1} parent=1 // pred_check_branch
      %40 = sbr.rel (0) target = $region17
    $region16: #{tpu_custom_call.1} parent=1 // pred_region
      %42 = dma.done [#allocation3], 256
    $region17: #{tpu_custom_call.1} parent=1 // pred_fallthru
      _
    // Predicated region
    $region18: #{tpu_custom_call.1} parent=1 // pred_check
      _
    $region19: #{tpu_custom_call.1} parent=1 // pred_check_branch
      %44 = sbr.rel (0) target = $region21
    $region20: #{tpu_custom_call.1} parent=1 // pred_region
      %46 = dma.done [#allocation6], 512
    $region21: #{tpu_custom_call.1} parent=1 // pred_fallthru
      _
    %v47 = vld [vmem:[#allocation2] sm:$0xff]
    %v48 = vld [vmem:[#allocation2 + $0x8] sm:$0xff]
    %v49 = vld [vmem:[#allocation5] sm:$0xff]
    %v50 = vld [vmem:[#allocation5 + $0x8] sm:$0xff]
    %v51 = vld [vmem:[#allocation5 + $0x10] sm:$0xff]
    %v52 = vld [vmem:[#allocation5 + $0x18] sm:$0xff]
    %v53 = vld [vmem:[%s2] sm:$0x1]
    %v55 = vperm.slane %v53, 0
    %vm57 = vcmask 261120
    %v59 = vsel %vm57, %v47, 0
    %v62 = vsel %vm57, %v48, 0
    %v65 = vsel %vm57, %v49, 0
    %v68 = vsel %vm57, %v50, 0
    %v71 = vsel %vm57, %v51, 0
    %v74 = vsel %vm57, %v52, 0
    %76 = vmatpush.xpose.msra.mxu0 0.0
    %77 = vmatpush.xpose.msra.mxu0 0.0
    %78 = vmatpush.xpose.msra.mxu0 0.0
    %79 = vmatpush.xpose.msra.mxu0 0.0
    %80 = vmatpush.xpose.msra.mxu0 0.0
    %81 = vmatpush.xpose.msra.mxu0 0.0
    %82 = vmatpush.xpose.msra.mxu0 0.0
    %83 = vmatpush.xpose.msra.mxu0 0.0
    %84 = vmatpush.xpose.msra.mxu0 0.0
    %85 = vmatpush.xpose.msra.mxu0 0.0
    %86 = vmatpush.xpose.msra.mxu0 0.0
    %87 = vmatpush.xpose.msra.mxu0 0.0
    %88 = vmatpush.xpose.msra.mxu0 %v74
    %89 = vmatpush.xpose.msra.mxu0 %v71
    %90 = vmatpush.xpose.msra.mxu0 %v68
    %91 = vmatpush.xpose.msra.mxu0 %v65
    %92 = vmatmul.f32.gmra.mxu0 %v59
    %v93 = vpop.f32.mrf.mxu0
    %v94 = vadd.f32 %v55, %v93
    %95 = vmatmul.f32.gmra.mxu0 %v62
    %v96 = vpop.f32.mrf.mxu0
    %v97 = vadd.f32 %v55, %v96
    %98 = vdwg.mxu0
    %99 = vst.msk [vmem:[#allocation7] sm:$0xff] %vm57, %v94
    %100 = vst.msk [vmem:[#allocation7 + $0x8] sm:$0xff] %vm57, %v97
    // Predicated region
    $region22: #{tpu_custom_call.1} parent=1 // pred_check
      _
    $region23: #{tpu_custom_call.1} parent=1 // pred_check_branch
      %102 = sbr.rel (0) target = $region25
    $region24: #{tpu_custom_call.1} parent=1 // pred_region
      %104 = vsyncadd [#allocation4], 0
      %s105 = sshll.u32 [#allocation7], 4
      %s106 = int_to_ptr.vmem [resolvable:$true] %s105
      %s107 = sshll.u32 %s3, 4
      %s108 = int_to_ptr.hbm [resolvable:$true] %s107
      %113 = dma.vmem_to_hbm [thread:$0]  %s106, 256, %s108, [#allocation4], 128, 128, 8
    $region25: #{tpu_custom_call.1} parent=1 // pred_fallthru
      _
    // Predicated region
    $region26: #{tpu_custom_call.1} parent=1 // pred_check
      _
    $region27: #{tpu_custom_call.1} parent=1 // pred_check_branch
      %115 = sbr.rel (0) target = $region29
    $region28: #{tpu_custom_call.1} parent=1 // pred_region
      %117 = dma.done [#allocation4], 256
    $region29: #{tpu_custom_call.1} parent=1 // pred_fallthru
      _
    %118 = vsyncpa [#allocation3], 1
    %119 = vsyncpa [#allocation6], 1
    %120 = vsyncpa [#allocation4], 1

</llo_original>
